<compile_context>
chip_gen: v7x
topology: tpu7x:2x2x1
jax: 0.10.0
libtpu: 0.0.40
codegen_flags: <defaults>
</compile_context>

<pallas_src>
import functools

import jax
import jax.numpy as jnp
from jax.experimental import pallas as pl
from jax.experimental.pallas import tpu as pltpu


def _round_up(a: int, b: int) -> int:
    return ((a + b - 1) // b) * b


# --------------------------------------------------------------------------
# Kernel 1: gating  gates = softmax(x @ Wg + bg)   (tiny, f32, exact)
# --------------------------------------------------------------------------
def _gating_kernel(x_ref, wg_ref, bg_ref, g_ref):
    logits = jnp.dot(x_ref[...], wg_ref[...],
                     preferred_element_type=jnp.float32)          # (bm, E)
    logits = logits + bg_ref[...]
    m = jnp.max(logits, axis=-1, keepdims=True)
    p = jnp.exp(logits - m)
    g_ref[...] = p / jnp.sum(p, axis=-1, keepdims=True)           # exact recip


# --------------------------------------------------------------------------
# Kernel 2: fused gate-weighted expert sum (single MXU matmul per tile)
# --------------------------------------------------------------------------
def _moe_kernel(x_ref, g_ref, w_ref, o_ref, *, num_experts):
    # x_ref: (bm, D_in)            compute dtype
    # g_ref: (bm, E)               f32 gates
    # w_ref: (E*D_in + E, bn)      [stacked expert weights ; expert biases]
    # o_ref: (bm, bn)
    x = x_ref[...]
    g = g_ref[...].astype(x.dtype)
    # x_aug = [g0*x | g1*x | ... | g_{E-1}*x | g]  -> one matmul does
    # sum_e g_e*(x @ We[e]) + g @ be  exactly.
    cols = [x * g[:, e:e + 1] for e in range(num_experts)]
    cols.append(g)
    x_aug = jnp.concatenate(cols, axis=-1)                        # (bm, K_aug)
    o_ref[...] = jnp.dot(x_aug, w_ref[...],
                         preferred_element_type=jnp.float32).astype(o_ref.dtype)


# --------------------------------------------------------------------------
# Wrapper
# --------------------------------------------------------------------------
def moe_forward(x, wg, bg, we, be, *, block_b=256, block_n=512,
                compute_dtype=None):
    """MoE forward pass.

    x:  [B, D_in]
    wg: [D_in, E]          gating weight (transposed nn.Linear weight)
    bg: [E]                gating bias
    we: [E, D_in, D_out]   expert weights (transposed nn.Linear weights)
    be: [E, D_out]         expert biases
    compute_dtype: None (use x.dtype) or e.g. jnp.bfloat16 for the
                   bf16-operand / f32-accumulate fast path (v6e/v7x).
    returns [B, D_out] in x.dtype
    """
    B, D_in = x.shape
    E, D_in_w, D_out = we.shape
    assert D_in_w == D_in and wg.shape == (D_in, E)
    assert bg.shape == (E,) and be.shape == (E, D_out)

    out_dtype = x.dtype
    cdt = jnp.dtype(compute_dtype) if compute_dtype is not None else jnp.dtype(x.dtype)
    isz = cdt.itemsize
    o_isz = jnp.dtype(out_dtype).itemsize

    # bf16 packs two rows per sublane -> 16-row batch alignment.
    align = 16 if isz < 4 else 8

    N_pad = _round_up(D_out, 128)
    K_aug = E * D_in + E                      # fused contraction depth

    # ---- generation-aware VMEM budget (~80% of physical per-core VMEM) ----
    try:
        vmem_cap = int(pltpu.get_tpu_info().vmem_capacity_bytes)
    except Exception:
        vmem_cap = 64 << 20                   # conservative (v7x-sized) fallback
    budget = (vmem_cap * 4) // 5

    # ---- tile selection with VMEM-aware shrink fallback ----
    bm = _round_up(min(block_b, _round_up(B, align)), align)
    bn = min(_round_up(block_n, 128), N_pad)
    if N_pad % bn:
        bn = 128                              # 128 always divides N_pad

    def _est(bm_, bn_):
        # double-buffered input/output blocks + slack for Mosaic scratch
        return 2 * (bm_ * D_in * isz + bm_ * E * 4
                    + K_aug * bn_ * isz + bm_ * bn_ * o_isz) + (4 << 20)

    while _est(bm, bn) > budget and bn > 128:
        nb = bn // 2
        bn = nb if N_pad % nb == 0 else 128
    while _est(bm, bn) > budget and bm > align:
        bm = max(align, _round_up(bm // 2, align))

    B_pad = _round_up(B, bm)
    ni = B_pad // bm
    nj = N_pad // bn
    vmem_limit = int(min(budget, max(_est(bm, bn) + (8 << 20), 32 << 20)))

    # ---- operand preparation (zero padding -> exact semantics) ----
    x_g = x.astype(jnp.float32)
    if B_pad != B:
        x_g = jnp.pad(x_g, ((0, B_pad - B), (0, 0)))
    if cdt == jnp.dtype(jnp.float32):
        x_c = x_g
    else:
        x_c = x.astype(cdt)
        if B_pad != B:
            x_c = jnp.pad(x_c, ((0, B_pad - B), (0, 0)))

    wg_f = wg.astype(jnp.float32)
    bg2 = bg.astype(jnp.float32).reshape(1, E)

    # [We0; We1; ...; We_{E-1}; be]  -> (E*D_in + E, N_pad)
    w_full = jnp.concatenate([we.reshape(E * D_in, D_out), be], axis=0).astype(cdt)
    if N_pad != D_out:
        w_full = jnp.pad(w_full, ((0, 0), (0, N_pad - D_out)))

    # ---- gating kernel (tiny, f32) ----
    gates = pl.pallas_call(
        _gating_kernel,
        out_shape=jax.ShapeDtypeStruct((B_pad, E), jnp.float32),
        grid_spec=pltpu.PrefetchScalarGridSpec(
            num_scalar_prefetch=0,
            grid=(ni,),
            in_specs=[
                pl.BlockSpec((bm, D_in), lambda i: (i, 0)),
                pl.BlockSpec((D_in, E), lambda i: (0, 0)),
                pl.BlockSpec((1, E), lambda i: (0, 0)),
            ],
            out_specs=pl.BlockSpec((bm, E), lambda i: (i, 0)),
        ),
        compiler_params=pltpu.CompilerParams(
            dimension_semantics=("parallel",)),
    )(x_g, wg_f, bg2)

    # ---- adaptive grid order: larger operand on the streamed-once axis ----
    x_stream = B_pad * (D_in * isz + E * 4)          # bytes re-streamed per extra D_out sweep
    w_stream = K_aug * N_pad * isz                   # bytes re-streamed per extra batch sweep
    dout_outer = (nj - 1) * x_stream <= (ni - 1) * w_stream

    if dout_outer:
        grid = (nj, ni)                              # weights streamed once
        x_map = lambda j, i: (i, 0)
        g_map = lambda j, i: (i, 0)
        w_map = lambda j, i: (0, j)
        o_map = lambda j, i: (i, j)
    else:
        grid = (ni, nj)                              # x/gates streamed once
        x_map = lambda i, j: (i, 0)
        g_map = lambda i, j: (i, 0)
        w_map = lambda i, j: (0, j)
        o_map = lambda i, j: (i, j)

    kernel = functools.partial(_moe_kernel, num_experts=E)

    out = pl.pallas_call(
        kernel,
        out_shape=jax.ShapeDtypeStruct((B_pad, N_pad), out_dtype),
        grid_spec=pltpu.PrefetchScalarGridSpec(
            num_scalar_prefetch=0,
            grid=grid,
            in_specs=[
                pl.BlockSpec((bm, D_in), x_map),       # batch tile of x
                pl.BlockSpec((bm, E), g_map),          # batch tile of gates
                pl.BlockSpec((K_aug, bn), w_map),      # fused weight+bias tile
            ],
            out_specs=pl.BlockSpec((bm, bn), o_map),
        ),
        compiler_params=pltpu.CompilerParams(
            dimension_semantics=("parallel", "parallel"),
            vmem_limit_bytes=vmem_limit),
    )(x_c, gates, w_full)

    return out[:B, :D_out]


def moe_reference(x, wg, bg, we, be):
    """Pure-JAX reference matching the torch forward exactly."""
    gate_scores = jax.nn.softmax(x @ wg + bg, axis=1)               # [B, E]
    expert_outputs = jnp.einsum("bd,edo->beo", x, we) + be[None]    # [B, E, D_out]
    return jnp.sum(gate_scores[..., None] * expert_outputs, axis=1)


if __name__ == "__main__":
    key = jax.random.PRNGKey(0)
    B, D_in, D_out, E = 16, 32, 32, 4

    kx, kwg, kbg, kwe, kbe = jax.random.split(key, 5)
    x = jax.random.normal(kx, (B, D_in), dtype=jnp.float32)

    bound = 1.0 / (D_in ** 0.5)
    wg = jax.random.uniform(kwg, (D_in, E), jnp.float32, -bound, bound)
    bg = jax.random.uniform(kbg, (E,), jnp.float32, -bound, bound)
    we = jax.random.uniform(kwe, (E, D_in, D_out), jnp.float32, -bound, bound)
    be = jax.random.uniform(kbe, (E, D_out), jnp.float32, -bound, bound)

    ref = moe_reference(x, wg, bg, we, be)

    # f32 path: tight agreement with the reference.
    out_f32 = jax.block_until_ready(moe_forward(x, wg, bg, we, be))
    assert out_f32.shape == (B, D_out)
    assert jnp.allclose(out_f32, ref, atol=2e-5, rtol=1e-5), "f32 mismatch vs reference"

    # bf16-operand / f32-accumulate fast path (recommended for v6e/v7x prod).
    out_bf16 = jax.block_until_ready(
        moe_forward(x, wg, bg, we, be, compute_dtype=jnp.bfloat16))
    assert out_bf16.shape == (B, D_out)
    assert jnp.allclose(out_bf16.astype(jnp.float32), ref,
                        atol=5e-2, rtol=5e-2), "bf16 mismatch vs reference"

    print("KERNEL_OK")
</pallas_src>

<mosaic_0001>
module attributes {stable_mosaic.version = 11 : i64} {
  func.func @_gating_kernel(%arg0: i32, %arg1: memref<16x32xf32, #tpu.memory_space<vmem>>, %arg2: memref<32x4xf32, #tpu.memory_space<vmem>>, %arg3: memref<1x4xf32, #tpu.memory_space<vmem>>, %arg4: memref<16x4xf32, #tpu.memory_space<vmem>>) attributes {dimension_semantics = [#tpu.dimension_semantics<parallel>], iteration_bounds = array<i64: 1>, scalar_prefetch = 0 : i64, scratch_operands = 0 : i64, tpu.core_type = #tpu.core_type<tc>, window_params = [{transform_indices = @transform_0, window_bounds = array<i64: 16, 32>}, {pipeline_mode = #tpu.pipeline_mode<synchronous>, transform_indices = @transform_1, window_bounds = array<i64: 32, 4>}, {pipeline_mode = #tpu.pipeline_mode<synchronous>, transform_indices = @transform_2, window_bounds = array<i64: 1, 4>}, {transform_indices = @transform_3, window_bounds = array<i64: 16, 4>}]} {
    %c0 = arith.constant 0 : index
    %c0_0 = arith.constant 0 : index
    %0 = vector.load %arg1[%c0, %c0_0] : memref<16x32xf32, #tpu.memory_space<vmem>>, vector<16x32xf32>
    %c0_1 = arith.constant 0 : index
    %c0_2 = arith.constant 0 : index
    %1 = vector.load %arg2[%c0_1, %c0_2] : memref<32x4xf32, #tpu.memory_space<vmem>>, vector<32x4xf32>
    %cst = arith.constant dense<0.000000e+00> : vector<16x4xf32>
    %2 = tpu.matmul %0, %1, %cst {dimension_numbers = #tpu.dot_dimension_numbers<[1], [0], [0], [1], [0, 0, 1, 1], [], []>} : vector<16x32xf32>, vector<32x4xf32>, vector<16x4xf32> -> vector<16x4xf32>
    %c0_3 = arith.constant 0 : index
    %c0_4 = arith.constant 0 : index
    %3 = vector.load %arg3[%c0_3, %c0_4] : memref<1x4xf32, #tpu.memory_space<vmem>>, vector<1x4xf32>
    %4 = vector.broadcast %3 : vector<1x4xf32> to vector<16x4xf32>
    %5 = arith.addf %2, %4 : vector<16x4xf32>
    %cst_5 = arith.constant dense<0xFF800000> : vector<16xf32>
    %6 = vector.multi_reduction <maximumf>, %5, %cst_5 [1] : vector<16x4xf32> to vector<16xf32>
    %7 = vector.shape_cast %6 : vector<16xf32> to vector<16x1xf32>
    %8 = vector.broadcast %7 : vector<16x1xf32> to vector<16x4xf32>
    %9 = arith.subf %5, %8 : vector<16x4xf32>
    %10 = math.exp %9 : vector<16x4xf32>
    %cst_6 = arith.constant dense<0.000000e+00> : vector<16xf32>
    %11 = vector.multi_reduction <add>, %10, %cst_6 [1] : vector<16x4xf32> to vector<16xf32>
    %12 = vector.shape_cast %11 : vector<16xf32> to vector<16x1xf32>
    %13 = vector.broadcast %12 : vector<16x1xf32> to vector<16x4xf32>
    %14 = arith.divf %10, %13 : vector<16x4xf32>
    %c0_7 = arith.constant 0 : index
    %c0_8 = arith.constant 0 : index
    %15 = vector.load %arg4[%c0_7, %c0_8] : memref<16x4xf32, #tpu.memory_space<vmem>>, vector<16x4xf32>
    tpu.vector_store %arg4[%c0_7, %c0_8], %14 {strides = array<i32>} : memref<16x4xf32, #tpu.memory_space<vmem>>, vector<16x4xf32>,
    return
  }
  func.func @transform_0(%arg0: i32) -> (i32, i32) {
    %c0_i32 = arith.constant 0 : i32
    %c0_i32_0 = arith.constant 0 : i32
    return %arg0, %c0_i32 : i32, i32
  }
  func.func @transform_1(%arg0: i32) -> (i32, i32) {
    %c0_i32 = arith.constant 0 : i32
    %c0_i32_0 = arith.constant 0 : i32
    %c0_i32_1 = arith.constant 0 : i32
    return %c0_i32, %c0_i32_0 : i32, i32
  }
  func.func @transform_2(%arg0: i32) -> (i32, i32) {
    %c0_i32 = arith.constant 0 : i32
    %c0_i32_0 = arith.constant 0 : i32
    %c0_i32_1 = arith.constant 0 : i32
    return %c0_i32, %c0_i32_0 : i32, i32
  }
  func.func @transform_3(%arg0: i32) -> (i32, i32) {
    %c0_i32 = arith.constant 0 : i32
    %c0_i32_0 = arith.constant 0 : i32
    return %arg0, %c0_i32 : i32, i32
  }
}

</mosaic_0001>

<llo_original>
// kernel: tpu_custom_call.1
$region0: #{tpu_custom_call.1}
  #allocation0 [shape = 'u32[]', space=smem, size = 0x4, offset = 0x4, fixed_abs, tag = 'smem constant byte address 0x4 - core index']
  #allocation1 [shape = 'u32[144,128]{1,0:T(1,128)}', space=vmem, size = 0x12000, scoped, tag = 'internal scratch']
  %s0 = inlined_call_operand.vmem [shape: f32[16,32], index: 0, kind: input, shape index: {}]
  %s1 = inlined_call_operand.vmem [shape: f32[32,4], index: 1, kind: input, shape index: {}]
  %s2 = inlined_call_operand.vmem [shape: f32[1,4], index: 2, kind: input, shape index: {}]
  %s3 = inlined_call_operand.vmem [shape: f32[16,4], index: 3, kind: output, shape index: {}]
  %s4 = sld [smem:[#allocation0]]
  $region22: #{tpu_custom_call.1} parent=0
    _
  %s6 = ssub.s32 1, %s4
  %s7 = scalar_select 0, %s6, %s4
  // Predicated region
  $region2: #{tpu_custom_call.1} parent=0 // pred_check
    _
  $region3: #{tpu_custom_call.1} parent=0 // pred_check_branch
    %9 = sbr.rel (0) target = $region5
  $region4: #{tpu_custom_call.1} parent=0 // pred_region
    _
  $region5: #{tpu_custom_call.1} parent=0 // pred_fallthru
    _
  // Predicated region
  $region6: #{tpu_custom_call.1} parent=0 // pred_check
    _
  $region7: #{tpu_custom_call.1} parent=0 // pred_check_branch
    %11 = sbr.rel (0) target = $region9
  $region8: #{tpu_custom_call.1} parent=0 // pred_region
    _
  $region9: #{tpu_custom_call.1} parent=0 // pred_fallthru
    _
  // Predicated region
  $region10: #{tpu_custom_call.1} parent=0 // pred_check
    _
  $region11: #{tpu_custom_call.1} parent=0 // pred_check_branch
    %13 = sbr.rel (0) target = $region13
  $region12: #{tpu_custom_call.1} parent=0 // pred_region
    _
  $region13: #{tpu_custom_call.1} parent=0 // pred_fallthru
    _
  %v14 = vld [vmem:[%s0] sm:$0xff]
  %v15 = vld [vmem:[%s0 + $0x8] sm:$0xff]
  %v16 = vld [vmem:[%s1] sm:$0xff]
  %v17 = vld [vmem:[%s1 + $0x8] sm:$0xff]
  %v18 = vld [vmem:[%s1 + $0x10] sm:$0xff]
  %v19 = vld [vmem:[%s1 + $0x18] sm:$0xff]
  %v20 = vld [vmem:[%s2] sm:$0x1]
  %v22 = vlaneseq
  %v23 = vshrl.u32 %v22, 7
  %v24 = vsub.s32 0, %v23
  %v25 = vrot.slane %v20, %v24
  %vm27 = vcmask 261120
  %v29 = vsel %vm27, %v14, 0
  %v32 = vsel %vm27, %v15, 0
  %34 = vmatprep.subr.mxu0 0.0
  %35 = vmatpush1.msra.mxu0 %v16
  %36 = vmatprep.subr.mxu0 0.0
  %37 = vmatpush1.msra.mxu0 %v17
  %38 = vmatprep.subr.mxu0 0.0
  %39 = vmatpush1.msra.mxu0 %v18
  %40 = vmatprep.subr.mxu0 0.0
  %41 = vmatpush1.msra.mxu0 %v19
  %42 = vmatprep.subr.mxu0 0.0
  %43 = vmatpush1.msra.mxu0 0.0
  %44 = vmatprep.subr.mxu0 0.0
  %45 = vmatpush1.msra.mxu0 0.0
  %46 = vmatprep.subr.mxu0 0.0
  %47 = vmatpush1.msra.mxu0 0.0
  %48 = vmatprep.subr.mxu0 0.0
  %49 = vmatpush1.msra.mxu0 0.0
  %50 = vmatprep.subr.mxu0 0.0
  %51 = vmatpush1.msra.mxu0 0.0
  %52 = vmatprep.subr.mxu0 0.0
  %53 = vmatpush1.msra.mxu0 0.0
  %54 = vmatprep.subr.mxu0 0.0
  %55 = vmatpush1.msra.mxu0 0.0
  %56 = vmatprep.subr.mxu0 0.0
  %57 = vmatpush1.msra.mxu0 0.0
  %58 = vmatprep.subr.mxu0 0.0
  %59 = vmatpush1.msra.mxu0 0.0
  %60 = vmatprep.subr.mxu0 0.0
  %61 = vmatpush1.msra.mxu0 0.0
  %62 = vmatprep.subr.mxu0 0.0
  %63 = vmatpush1.msra.mxu0 0.0
  %64 = vmatprep.subr.mxu0 0.0
  %65 = vmatpush1.msra.mxu0 0.0
  %66 = vmatprep.subr.mxu0 0.0
  %67 = vmatpush1.msra.mxu0 0.0
  %68 = vmatprep.subr.mxu0 0.0
  %69 = vmatpush1.msra.mxu0 0.0
  %70 = vmatprep.subr.mxu0 0.0
  %71 = vmatpush1.msra.mxu0 0.0
  %72 = vmatprep.subr.mxu0 0.0
  %73 = vmatpush1.msra.mxu0 0.0
  %74 = vmatprep.subr.mxu0 0.0
  %75 = vmatpush1.msra.mxu0 0.0
  %76 = vmatprep.subr.mxu0 0.0
  %77 = vmatpush1.msra.mxu0 0.0
  %78 = vmatprep.subr.mxu0 0.0
  %79 = vmatpush1.msra.mxu0 0.0
  %80 = vmatprep.subr.mxu0 0.0
  %81 = vmatpush1.msra.mxu0 0.0
  %82 = vmatprep.subr.mxu0 0.0
  %83 = vmatpush1.msra.mxu0 0.0
  %84 = vmatprep.subr.mxu0 0.0
  %85 = vmatpush1.msra.mxu0 0.0
  %86 = vmatprep.subr.mxu0 0.0
  %87 = vmatpush1.msra.mxu0 0.0
  %88 = vmatprep.subr.mxu0 0.0
  %89 = vmatpush1.msra.mxu0 0.0
  %90 = vmatprep.subr.mxu0 0.0
  %91 = vmatpush1.msra.mxu0 0.0
  %92 = vmatprep.subr.mxu0 0.0
  %93 = vmatpush1.msra.mxu0 0.0
  %94 = vmatprep.subr.mxu0 0.0
  %95 = vmatpush1.msra.mxu0 0.0
  %96 = vmatprep.subr.mxu0 0.0
  %97 = vmatpush1.msra.mxu0 0.0
  %98 = vmatprep.mubr.f32.mxu0 0.0
  %99 = vmatmul.mubr.f32.gmra.mrb[0].mxu0 %v29
  %v100 = vpop.f32.mrb[0].mxu0
  %v101 = vadd.f32 %v25, %v100
  %v102 = vpop.f32.mrb[0].mxu0
  %103 = vmatprep.mubr.f32.mxu0 0.0
  %104 = vmatmul.mubr.f32.gmra.mrb[0].mxu0 %v32
  %v105 = vpop.f32.mrb[0].mxu0
  %v106 = vadd.f32 %v25, %v105
  %v107 = vpop.f32.mrb[0].mxu0
  %108 = vdwg.mxu0
  %vm109 = vcmask 31744
  %v110 = vsel %vm109, %v101, -inf
  %111 = vmax.xlane.f32.xlu0 %v110
  %v112 = vpop.xlane.xlu0 %111
  %v113 = vsel %vm109, %v106, -inf
  %114 = vmax.xlane.f32.xlu0 %v113
  %v115 = vpop.xlane.xlu0 %114
  %v116 = vsub.f32 %v101, %v112
  %v117 = vsub.f32 %v106, %v115
  %v118 = vmul.f32 %v116, 1.442695
  %v119 = vpow.pop %v118
  %v120 = vmul.f32 %v117, 1.442695
  %v121 = vpow.pop %v120
  %v122 = vsel %vm109, %v119, 0.0
  %123 = vadd.xlane.f32.xlu0 %v122
  %v124 = vpop.xlane.xlu0 %123
  %v125 = vsel %vm109, %v121, 0.0
  %126 = vadd.xlane.f32.xlu0 %v125
  %v127 = vpop.xlane.xlu0 %126
  %v128 = vrcp.pop %v124
  %v129 = vmul.f32 %v119, %v128
  %v130 = vrcp.pop %v127
  %v131 = vmul.f32 %v121, %v130
  %132 = vst.msk [vmem:[%s3] sm:$0xff] %vm109, %v129
  %133 = vst.msk [vmem:[%s3 + $0x8] sm:$0xff] %vm109, %v131
  // Predicated region
  $region14: #{tpu_custom_call.1} parent=0 // pred_check
    _
  $region15: #{tpu_custom_call.1} parent=0 // pred_check_branch
    %135 = sbr.rel (0) target = $region17
  $region16: #{tpu_custom_call.1} parent=0 // pred_region
    _
  $region17: #{tpu_custom_call.1} parent=0 // pred_fallthru
    _
  // Predicated region
  $region18: #{tpu_custom_call.1} parent=0 // pred_check
    _
  $region19: #{tpu_custom_call.1} parent=0 // pred_check_branch
    %137 = sbr.rel (0) target = $region21
  $region20: #{tpu_custom_call.1} parent=0 // pred_region
    _
  $region21: #{tpu_custom_call.1} parent=0 // pred_fallthru
    _

</llo_original>
